<compile_context>
chip_gen: v7x
topology: tpu7x:2x2x1
jax: 0.10.0
libtpu: 0.0.40
codegen_flags: <defaults>
</compile_context>

<pallas_src>
import math
import functools
import jax
import jax.numpy as jnp
from jax.experimental import pallas as pl
from jax.experimental.pallas import tpu as pltpu

IN_DIM = 8        # real input feature width of Linear(8, 6) — also x's lane width
HID = 128         # padded hidden lane width (real widths 6 and 4)
OUT_W = 8         # padded output lane width (real width 1)
SUBLANE = 8       # batch padding granularity
DEFAULT_TB = 512  # batch tile for large batches (well under scoped-VMEM on all gens)


def _round_up(n, m):
    return ((n + m - 1) // m) * m


def _pad2d(a, rows, cols):
    return jnp.zeros((rows, cols), a.dtype).at[: a.shape[0], : a.shape[1]].set(a)


def _mlp_kernel(x_ref, w1_ref, b1_ref, w2_ref, b2_ref, w3_ref, b3_ref, o_ref):
    # One batch tile:
    #   (TB, 8) @ (8, 128)   -> +b1 -> sigmoid
    #   (TB,128)@ (128, 128) -> +b2 -> sigmoid
    #   (TB,128)@ (128, 8)   -> +b3 -> sigmoid -> store (only lane 0 is real)
    # Padded hidden columns come out as sigmoid(0)=0.5 but the matching
    # (zero) weight rows of w2/w3 cancel them exactly.
    h = jnp.dot(x_ref[...], w1_ref[...], preferred_element_type=jnp.float32)
    h = jax.nn.sigmoid(h + b1_ref[...])
    h = jnp.dot(h, w2_ref[...], preferred_element_type=jnp.float32)
    h = jax.nn.sigmoid(h + b2_ref[...])
    h = jnp.dot(h, w3_ref[...], preferred_element_type=jnp.float32)
    h = jax.nn.sigmoid(h + b3_ref[...])
    o_ref[...] = h.astype(o_ref.dtype)


def prepare_params(params):
    """Pad + transpose torch-layout params ONCE (hoisted out of the per-call path).

    torch Linear stores weight as (out, in); we store (in, out) so the kernel
    computes y = x @ W + b. Padded rows/cols are exact zeros (correctness invariant).
    """
    return dict(
        w1=_pad2d(params["w1"].T.astype(jnp.float32), IN_DIM, HID),    # (8, 128)
        b1=_pad2d(params["b1"][None, :].astype(jnp.float32), 1, HID),  # (1, 128)
        w2=_pad2d(params["w2"].T.astype(jnp.float32), HID, HID),       # (128, 128)
        b2=_pad2d(params["b2"][None, :].astype(jnp.float32), 1, HID),  # (1, 128)
        w3=_pad2d(params["w3"].T.astype(jnp.float32), HID, OUT_W),     # (128, 8)
        b3=_pad2d(params["b3"][None, :].astype(jnp.float32), 1, OUT_W),# (1, 8)
    )


@functools.partial(jax.jit, static_argnames=("tb",))
def multiple_model_forward(x, padded, tb=DEFAULT_TB):
    """x: (B, 8) float32.  padded: output of prepare_params.  Returns (B, 1)."""
    B = x.shape[0]
    # Batch tile: whole (rounded-up) batch when small, DEFAULT_TB when large.
    TB = min(tb, _round_up(max(B, SUBLANE), SUBLANE))
    Bp = _round_up(max(B, SUBLANE), TB)

    # Only the batch dim is padded; feature dim stays at its real width (8).
    x_p = _pad2d(x.astype(jnp.float32), Bp, IN_DIM)   # (Bp, 8)

    def resident(shape):
        # Constant index_map: same block every grid step -> stays in VMEM.
        return pl.BlockSpec(shape, lambda i: (0, 0))

    out = pl.pallas_call(
        _mlp_kernel,
        out_shape=jax.ShapeDtypeStruct((Bp, OUT_W), jnp.float32),
        grid=(Bp // TB,),
        in_specs=[
            pl.BlockSpec((TB, IN_DIM), lambda i: (i, 0)),   # streamed batch tile
            resident((IN_DIM, HID)),
            resident((1, HID)),
            resident((HID, HID)),
            resident((1, HID)),
            resident((HID, OUT_W)),
            resident((1, OUT_W)),
        ],
        out_specs=pl.BlockSpec((TB, OUT_W), lambda i: (i, 0)),
        compiler_params=pltpu.CompilerParams(
            dimension_semantics=("parallel",),   # megacore-shard the batch axis (v7x)
        ),
    )(x_p, padded["w1"], padded["b1"], padded["w2"], padded["b2"],
      padded["w3"], padded["b3"])

    return out[:B, :1]   # (B, 1), matching Linear(4, 1) output


def init_params(key):
    """Deterministic init mimicking torch.nn.Linear default U(-1/sqrt(in), 1/sqrt(in))."""
    specs = [("w1", (6, 8), 8), ("b1", (6,), 8),
             ("w2", (4, 6), 6), ("b2", (4,), 6),
             ("w3", (1, 4), 4), ("b3", (1,), 4)]
    keys = jax.random.split(key, len(specs))
    params = {}
    for k, (name, shape, fan_in) in zip(keys, specs):
        bound = 1.0 / math.sqrt(fan_in)
        params[name] = jax.random.uniform(
            k, shape, dtype=jnp.float32, minval=-bound, maxval=bound
        )
    return params


if __name__ == "__main__":
    key = jax.random.PRNGKey(0)
    pkey, xkey = jax.random.split(key)
    params = init_params(pkey)
    padded = prepare_params(params)   # pad/transpose once, reused across calls

    B = 16  # small batch; input feature dim fixed at 8 by the module
    x = jax.random.normal(xkey, (B, 8), dtype=jnp.float32)

    y = multiple_model_forward(x, padded)
    y = jax.block_until_ready(y)

    # Pure-JAX reference of the same math.
    def ref(x, p):
        h = jax.nn.sigmoid(x @ p["w1"].T + p["b1"])
        h = jax.nn.sigmoid(h @ p["w2"].T + p["b2"])
        return jax.nn.sigmoid(h @ p["w3"].T + p["b3"])

    y_ref = ref(x, params)
    assert y.shape == (B, 1), y.shape
    assert jnp.allclose(y, y_ref, atol=1e-5, rtol=1e-5), float(jnp.max(jnp.abs(y - y_ref)))

    print("KERNEL_OK")
</pallas_src>

<mosaic_0001>
module attributes {stable_mosaic.version = 11 : i64} {
  func.func @_mlp_kernel(%arg0: i32, %arg1: memref<16x8xf32, #tpu.memory_space<vmem>>, %arg2: memref<8x128xf32, #tpu.memory_space<vmem>>, %arg3: memref<1x128xf32, #tpu.memory_space<vmem>>, %arg4: memref<128x128xf32, #tpu.memory_space<vmem>>, %arg5: memref<1x128xf32, #tpu.memory_space<vmem>>, %arg6: memref<128x8xf32, #tpu.memory_space<vmem>>, %arg7: memref<1x8xf32, #tpu.memory_space<vmem>>, %arg8: memref<16x8xf32, #tpu.memory_space<vmem>>) attributes {dimension_semantics = [#tpu.dimension_semantics<parallel>], iteration_bounds = array<i64: 1>, scalar_prefetch = 0 : i64, scratch_operands = 0 : i64, tpu.core_type = #tpu.core_type<tc>, window_params = [{transform_indices = @transform_0, window_bounds = array<i64: 16, 8>}, {pipeline_mode = #tpu.pipeline_mode<synchronous>, transform_indices = @transform_1, window_bounds = array<i64: 8, 128>}, {pipeline_mode = #tpu.pipeline_mode<synchronous>, transform_indices = @transform_2, window_bounds = array<i64: 1, 128>}, {pipeline_mode = #tpu.pipeline_mode<synchronous>, transform_indices = @transform_3, window_bounds = array<i64: 128, 128>}, {pipeline_mode = #tpu.pipeline_mode<synchronous>, transform_indices = @transform_4, window_bounds = array<i64: 1, 128>}, {pipeline_mode = #tpu.pipeline_mode<synchronous>, transform_indices = @transform_5, window_bounds = array<i64: 128, 8>}, {pipeline_mode = #tpu.pipeline_mode<synchronous>, transform_indices = @transform_6, window_bounds = array<i64: 1, 8>}, {transform_indices = @transform_7, window_bounds = array<i64: 16, 8>}]} {
    %c0 = arith.constant 0 : index
    %c0_0 = arith.constant 0 : index
    %0 = vector.load %arg1[%c0, %c0_0] : memref<16x8xf32, #tpu.memory_space<vmem>>, vector<16x8xf32>
    %c0_1 = arith.constant 0 : index
    %c0_2 = arith.constant 0 : index
    %1 = vector.load %arg2[%c0_1, %c0_2] : memref<8x128xf32, #tpu.memory_space<vmem>>, vector<8x128xf32>
    %cst = arith.constant dense<0.000000e+00> : vector<16x128xf32>
    %2 = tpu.matmul %0, %1, %cst {dimension_numbers = #tpu.dot_dimension_numbers<[1], [0], [0], [1], [0, 0, 1, 1], [], []>} : vector<16x8xf32>, vector<8x128xf32>, vector<16x128xf32> -> vector<16x128xf32>
    %c0_3 = arith.constant 0 : index
    %c0_4 = arith.constant 0 : index
    %3 = vector.load %arg3[%c0_3, %c0_4] : memref<1x128xf32, #tpu.memory_space<vmem>>, vector<1x128xf32>
    %4 = vector.broadcast %3 : vector<1x128xf32> to vector<16x128xf32>
    %5 = arith.addf %2, %4 : vector<16x128xf32>
    %6 = arith.negf %5 : vector<16x128xf32>
    %7 = math.exp %6 : vector<16x128xf32>
    %cst_5 = arith.constant 1.000000e+00 : f32
    %8 = vector.broadcast %cst_5 : f32 to vector<16x128xf32>
    %9 = arith.addf %8, %7 : vector<16x128xf32>
    %10 = arith.divf %8, %9 : vector<16x128xf32>
    %c0_6 = arith.constant 0 : index
    %c0_7 = arith.constant 0 : index
    %11 = vector.load %arg4[%c0_6, %c0_7] : memref<128x128xf32, #tpu.memory_space<vmem>>, vector<128x128xf32>
    %cst_8 = arith.constant dense<0.000000e+00> : vector<16x128xf32>
    %12 = tpu.matmul %10, %11, %cst_8 {dimension_numbers = #tpu.dot_dimension_numbers<[1], [0], [0], [1], [0, 0, 1, 1], [], []>} : vector<16x128xf32>, vector<128x128xf32>, vector<16x128xf32> -> vector<16x128xf32>
    %c0_9 = arith.constant 0 : index
    %c0_10 = arith.constant 0 : index
    %13 = vector.load %arg5[%c0_9, %c0_10] : memref<1x128xf32, #tpu.memory_space<vmem>>, vector<1x128xf32>
    %14 = vector.broadcast %13 : vector<1x128xf32> to vector<16x128xf32>
    %15 = arith.addf %12, %14 : vector<16x128xf32>
    %16 = arith.negf %15 : vector<16x128xf32>
    %17 = math.exp %16 : vector<16x128xf32>
    %cst_11 = arith.constant 1.000000e+00 : f32
    %18 = vector.broadcast %cst_11 : f32 to vector<16x128xf32>
    %19 = arith.addf %18, %17 : vector<16x128xf32>
    %20 = arith.divf %18, %19 : vector<16x128xf32>
    %c0_12 = arith.constant 0 : index
    %c0_13 = arith.constant 0 : index
    %21 = vector.load %arg6[%c0_12, %c0_13] : memref<128x8xf32, #tpu.memory_space<vmem>>, vector<128x8xf32>
    %cst_14 = arith.constant dense<0.000000e+00> : vector<16x8xf32>
    %22 = tpu.matmul %20, %21, %cst_14 {dimension_numbers = #tpu.dot_dimension_numbers<[1], [0], [0], [1], [0, 0, 1, 1], [], []>} : vector<16x128xf32>, vector<128x8xf32>, vector<16x8xf32> -> vector<16x8xf32>
    %c0_15 = arith.constant 0 : index
    %c0_16 = arith.constant 0 : index
    %23 = vector.load %arg7[%c0_15, %c0_16] : memref<1x8xf32, #tpu.memory_space<vmem>>, vector<1x8xf32>
    %24 = vector.broadcast %23 : vector<1x8xf32> to vector<16x8xf32>
    %25 = arith.addf %22, %24 : vector<16x8xf32>
    %26 = arith.negf %25 : vector<16x8xf32>
    %27 = math.exp %26 : vector<16x8xf32>
    %cst_17 = arith.constant 1.000000e+00 : f32
    %28 = vector.broadcast %cst_17 : f32 to vector<16x8xf32>
    %29 = arith.addf %28, %27 : vector<16x8xf32>
    %30 = arith.divf %28, %29 : vector<16x8xf32>
    %c0_18 = arith.constant 0 : index
    %c0_19 = arith.constant 0 : index
    %31 = vector.load %arg8[%c0_18, %c0_19] : memref<16x8xf32, #tpu.memory_space<vmem>>, vector<16x8xf32>
    tpu.vector_store %arg8[%c0_18, %c0_19], %30 {strides = array<i32>} : memref<16x8xf32, #tpu.memory_space<vmem>>, vector<16x8xf32>,
    return
  }
  func.func @transform_0(%arg0: i32) -> (i32, i32) {
    %c0_i32 = arith.constant 0 : i32
    %c0_i32_0 = arith.constant 0 : i32
    return %arg0, %c0_i32 : i32, i32
  }
  func.func @transform_1(%arg0: i32) -> (i32, i32) {
    %c0_i32 = arith.constant 0 : i32
    %c0_i32_0 = arith.constant 0 : i32
    %c0_i32_1 = arith.constant 0 : i32
    return %c0_i32, %c0_i32_0 : i32, i32
  }
  func.func @transform_2(%arg0: i32) -> (i32, i32) {
    %c0_i32 = arith.constant 0 : i32
    %c0_i32_0 = arith.constant 0 : i32
    %c0_i32_1 = arith.constant 0 : i32
    return %c0_i32, %c0_i32_0 : i32, i32
  }
  func.func @transform_3(%arg0: i32) -> (i32, i32) {
    %c0_i32 = arith.constant 0 : i32
    %c0_i32_0 = arith.constant 0 : i32
    %c0_i32_1 = arith.constant 0 : i32
    return %c0_i32, %c0_i32_0 : i32, i32
  }
  func.func @transform_4(%arg0: i32) -> (i32, i32) {
    %c0_i32 = arith.constant 0 : i32
    %c0_i32_0 = arith.constant 0 : i32
    %c0_i32_1 = arith.constant 0 : i32
    return %c0_i32, %c0_i32_0 : i32, i32
  }
  func.func @transform_5(%arg0: i32) -> (i32, i32) {
    %c0_i32 = arith.constant 0 : i32
    %c0_i32_0 = arith.constant 0 : i32
    %c0_i32_1 = arith.constant 0 : i32
    return %c0_i32, %c0_i32_0 : i32, i32
  }
  func.func @transform_6(%arg0: i32) -> (i32, i32) {
    %c0_i32 = arith.constant 0 : i32
    %c0_i32_0 = arith.constant 0 : i32
    %c0_i32_1 = arith.constant 0 : i32
    return %c0_i32, %c0_i32_0 : i32, i32
  }
  func.func @transform_7(%arg0: i32) -> (i32, i32) {
    %c0_i32 = arith.constant 0 : i32
    %c0_i32_0 = arith.constant 0 : i32
    return %arg0, %c0_i32 : i32, i32
  }
}

</mosaic_0001>

<llo_original>
// kernel: multiple_model_forward.1
$region0: #{multiple_model_forward.1}
  #allocation0 [shape = 'u32[]', space=smem, size = 0x4, offset = 0x4, fixed_abs, tag = 'smem constant byte address 0x4 - core index']
  #allocation1 [shape = 'u32[144,128]{1,0:T(1,128)}', space=vmem, size = 0x12000, scoped, tag = 'internal scratch']
  %s0 = inlined_call_operand.vmem [shape: f32[16,8], index: 0, kind: input, shape index: {}]
  %s1 = inlined_call_operand.vmem [shape: f32[8,128], index: 1, kind: input, shape index: {}]
  %s2 = inlined_call_operand.vmem [shape: f32[1,128], index: 2, kind: input, shape index: {}]
  %s3 = inlined_call_operand.vmem [shape: f32[128,128], index: 3, kind: input, shape index: {}]
  %s4 = inlined_call_operand.vmem [shape: f32[1,128], index: 4, kind: input, shape index: {}]
  %s5 = inlined_call_operand.vmem [shape: f32[128,8], index: 5, kind: input, shape index: {}]
  %s6 = inlined_call_operand.vmem [shape: f32[1,8], index: 6, kind: input, shape index: {}]
  %s7 = inlined_call_operand.vmem [shape: f32[16,8], index: 7, kind: output, shape index: {}]
  %s8 = sld [smem:[#allocation0]]
  $region38: #{multiple_model_forward.1} parent=0
    _
  %s10 = ssub.s32 1, %s8
  %s11 = scalar_select 0, %s10, %s8
  // Predicated region
  $region2: #{multiple_model_forward.1} parent=0 // pred_check
    _
  $region3: #{multiple_model_forward.1} parent=0 // pred_check_branch
    %13 = sbr.rel (0) target = $region5
  $region4: #{multiple_model_forward.1} parent=0 // pred_region
    _
  $region5: #{multiple_model_forward.1} parent=0 // pred_fallthru
    _
  // Predicated region
  $region6: #{multiple_model_forward.1} parent=0 // pred_check
    _
  $region7: #{multiple_model_forward.1} parent=0 // pred_check_branch
    %15 = sbr.rel (0) target = $region9
  $region8: #{multiple_model_forward.1} parent=0 // pred_region
    _
  $region9: #{multiple_model_forward.1} parent=0 // pred_fallthru
    _
  // Predicated region
  $region10: #{multiple_model_forward.1} parent=0 // pred_check
    _
  $region11: #{multiple_model_forward.1} parent=0 // pred_check_branch
    %17 = sbr.rel (0) target = $region13
  $region12: #{multiple_model_forward.1} parent=0 // pred_region
    _
  $region13: #{multiple_model_forward.1} parent=0 // pred_fallthru
    _
  // Predicated region
  $region14: #{multiple_model_forward.1} parent=0 // pred_check
    _
  $region15: #{multiple_model_forward.1} parent=0 // pred_check_branch
    %19 = sbr.rel (0) target = $region17
  $region16: #{multiple_model_forward.1} parent=0 // pred_region
    _
  $region17: #{multiple_model_forward.1} parent=0 // pred_fallthru
    _
  // Predicated region
  $region18: #{multiple_model_forward.1} parent=0 // pred_check
    _
  $region19: #{multiple_model_forward.1} parent=0 // pred_check_branch
    %21 = sbr.rel (0) target = $region21
  $region20: #{multiple_model_forward.1} parent=0 // pred_region
    _
  $region21: #{multiple_model_forward.1} parent=0 // pred_fallthru
    _
  // Predicated region
  $region22: #{multiple_model_forward.1} parent=0 // pred_check
    _
  $region23: #{multiple_model_forward.1} parent=0 // pred_check_branch
    %23 = sbr.rel (0) target = $region25
  $region24: #{multiple_model_forward.1} parent=0 // pred_region
    _
  $region25: #{multiple_model_forward.1} parent=0 // pred_fallthru
    _
  // Predicated region
  $region26: #{multiple_model_forward.1} parent=0 // pred_check
    _
  $region27: #{multiple_model_forward.1} parent=0 // pred_check_branch
    %25 = sbr.rel (0) target = $region29
  $region28: #{multiple_model_forward.1} parent=0 // pred_region
    _
  $region29: #{multiple_model_forward.1} parent=0 // pred_fallthru
    _
  %v26 = vld [vmem:[%s0] sm:$0xff]
  %v27 = vld [vmem:[%s0 + $0x8] sm:$0xff]
  %v28 = vld [vmem:[%s1] sm:$0xff]
  %v29 = vld [vmem:[%s2] sm:$0x1]
  %v31 = vlaneseq
  %v32 = vshrl.u32 %v31, 7
  %v33 = vsub.s32 0, %v32
  %v34 = vrot.slane %v29, %v33
  %vm36 = vcmask 64512
  %v38 = vsel %vm36, %v26, 0
  %v41 = vsel %vm36, %v27, 0
  %43 = vmatprep.subr.mxu0 0.0
  %44 = vmatpush1.msra.mxu0 %v28
  %45 = vmatprep.subr.mxu0 0.0
  %46 = vmatpush1.msra.mxu0 0.0
  %47 = vmatprep.subr.mxu0 0.0
  %48 = vmatpush1.msra.mxu0 0.0
  %49 = vmatprep.subr.mxu0 0.0
  %50 = vmatpush1.msra.mxu0 0.0
  %51 = vmatprep.subr.mxu0 0.0
  %52 = vmatpush1.msra.mxu0 0.0
  %53 = vmatprep.subr.mxu0 0.0
  %54 = vmatpush1.msra.mxu0 0.0
  %55 = vmatprep.subr.mxu0 0.0
  %56 = vmatpush1.msra.mxu0 0.0
  %57 = vmatprep.subr.mxu0 0.0
  %58 = vmatpush1.msra.mxu0 0.0
  %59 = vmatprep.subr.mxu0 0.0
  %60 = vmatpush1.msra.mxu0 0.0
  %61 = vmatprep.subr.mxu0 0.0
  %62 = vmatpush1.msra.mxu0 0.0
  %63 = vmatprep.subr.mxu0 0.0
  %64 = vmatpush1.msra.mxu0 0.0
  %65 = vmatprep.subr.mxu0 0.0
  %66 = vmatpush1.msra.mxu0 0.0
  %67 = vmatprep.subr.mxu0 0.0
  %68 = vmatpush1.msra.mxu0 0.0
  %69 = vmatprep.subr.mxu0 0.0
  %70 = vmatpush1.msra.mxu0 0.0
  %71 = vmatprep.subr.mxu0 0.0
  %72 = vmatpush1.msra.mxu0 0.0
  %73 = vmatprep.subr.mxu0 0.0
  %74 = vmatpush1.msra.mxu0 0.0
  %75 = vmatprep.subr.mxu0 0.0
  %76 = vmatpush1.msra.mxu0 0.0
  %77 = vmatprep.subr.mxu0 0.0
  %78 = vmatpush1.msra.mxu0 0.0
  %79 = vmatprep.subr.mxu0 0.0
  %80 = vmatpush1.msra.mxu0 0.0
  %81 = vmatprep.subr.mxu0 0.0
  %82 = vmatpush1.msra.mxu0 0.0
  %83 = vmatprep.subr.mxu0 0.0
  %84 = vmatpush1.msra.mxu0 0.0
  %85 = vmatprep.subr.mxu0 0.0
  %86 = vmatpush1.msra.mxu0 0.0
  %87 = vmatprep.subr.mxu0 0.0
  %88 = vmatpush1.msra.mxu0 0.0
  %89 = vmatprep.subr.mxu0 0.0
  %90 = vmatpush1.msra.mxu0 0.0
  %91 = vmatprep.subr.mxu0 0.0
  %92 = vmatpush1.msra.mxu0 0.0
  %93 = vmatprep.subr.mxu0 0.0
  %94 = vmatpush1.msra.mxu0 0.0
  %95 = vmatprep.subr.mxu0 0.0
  %96 = vmatpush1.msra.mxu0 0.0
  %97 = vmatprep.subr.mxu0 0.0
  %98 = vmatpush1.msra.mxu0 0.0
  %99 = vmatprep.subr.mxu0 0.0
  %100 = vmatpush1.msra.mxu0 0.0
  %101 = vmatprep.subr.mxu0 0.0
  %102 = vmatpush1.msra.mxu0 0.0
  %103 = vmatprep.subr.mxu0 0.0
  %104 = vmatpush1.msra.mxu0 0.0
  %105 = vmatprep.subr.mxu0 0.0
  %106 = vmatpush1.msra.mxu0 0.0
  %107 = vmatprep.mubr.f32.mxu0 0.0
  %108 = vmatmul.mubr.f32.gmra.mrb[0].mxu0 %v38
  %v109 = vpop.f32.mrb[0].mxu0
  %v110 = vadd.f32 %v34, %v109
  %v111 = vpop.f32.mrb[0].mxu0
  %112 = vmatprep.mubr.f32.mxu0 0.0
  %113 = vmatmul.mubr.f32.gmra.mrb[0].mxu0 %v41
  %v114 = vpop.f32.mrb[0].mxu0
  %v115 = vadd.f32 %v34, %v114
  %v116 = vpop.f32.mrb[0].mxu0
  %117 = vdwg.mxu0
  %v118 = vxor.u32 %v110, 2147483648
  %v119 = vxor.u32 %v115, 2147483648
  %v120 = vmul.f32 %v118, 1.442695
  %v121 = vpow.pop %v120
  %v122 = vmul.f32 %v119, 1.442695
  %v123 = vpow.pop %v122
  %v124 = vadd.f32 %v121, 1.0
  %v125 = vadd.f32 %v123, 1.0
  %v126 = vrcp.pop %v124
  %v127 = vmul.f32 1.0, %v126
  %v128 = vrcp.pop %v125
  %v129 = vmul.f32 1.0, %v128
  %v130 = vld [vmem:[%s3] sm:$0xff]
  %v131 = vld [vmem:[%s3 + $0x8] sm:$0xff]
  %v132 = vld [vmem:[%s3 + $0x10] sm:$0xff]
  %v133 = vld [vmem:[%s3 + $0x18] sm:$0xff]
  %v134 = vld [vmem:[%s3 + $0x20] sm:$0xff]
  %v135 = vld [vmem:[%s3 + $0x28] sm:$0xff]
  %v136 = vld [vmem:[%s3 + $0x30] sm:$0xff]
  %v137 = vld [vmem:[%s3 + $0x38] sm:$0xff]
  %v138 = vld [vmem:[%s3 + $0x40] sm:$0xff]
  %v139 = vld [vmem:[%s3 + $0x48] sm:$0xff]
  %v140 = vld [vmem:[%s3 + $0x50] sm:$0xff]
  %v141 = vld [vmem:[%s3 + $0x58] sm:$0xff]
  %v142 = vld [vmem:[%s3 + $0x60] sm:$0xff]
  %v143 = vld [vmem:[%s3 + $0x68] sm:$0xff]
  %v144 = vld [vmem:[%s3 + $0x70] sm:$0xff]
  %v145 = vld [vmem:[%s3 + $0x78] sm:$0xff]
  %v146 = vld [vmem:[%s4] sm:$0x1]
  %v148 = vlaneseq
  %v149 = vshrl.u32 %v148, 7
  %v150 = vsub.s32 0, %v149
  %v151 = vrot.slane %v146, %v150
  %153 = vmatprep.subr.mxu0 0.0
  %154 = vmatpush1.msra.mxu0 %v130
  %155 = vmatprep.subr.mxu0 0.0
  %156 = vmatpush1.msra.mxu0 %v131
  %157 = vmatprep.subr.mxu0 0.0
  %158 = vmatpush1.msra.mxu0 %v132
  %159 = vmatprep.subr.mxu0 0.0
  %160 = vmatpush1.msra.mxu0 %v133
  %161 = vmatprep.subr.mxu0 0.0
  %162 = vmatpush1.msra.mxu0 %v134
  %163 = vmatprep.subr.mxu0 0.0
  %164 = vmatpush1.msra.mxu0 %v135
  %165 = vmatprep.subr.mxu0 0.0
  %166 = vmatpush1.msra.mxu0 %v136
  %167 = vmatprep.subr.mxu0 0.0
  %168 = vmatpush1.msra.mxu0 %v137
  %169 = vmatprep.subr.mxu0 0.0
  %170 = vmatpush1.msra.mxu0 %v138
  %171 = vmatprep.subr.mxu0 0.0
  %172 = vmatpush1.msra.mxu0 %v139
  %173 = vmatprep.subr.mxu0 0.0
  %174 = vmatpush1.msra.mxu0 %v140
  %175 = vmatprep.subr.mxu0 0.0
  %176 = vmatpush1.msra.mxu0 %v141
  %177 = vmatprep.subr.mxu0 0.0
  %178 = vmatpush1.msra.mxu0 %v142
  %179 = vmatprep.subr.mxu0 0.0
  %180 = vmatpush1.msra.mxu0 %v143
  %181 = vmatprep.subr.mxu0 0.0
  %182 = vmatpush1.msra.mxu0 %v144
  %183 = vmatprep.subr.mxu0 0.0
  %184 = vmatpush1.msra.mxu0 %v145
  %185 = vmatprep.subr.mxu0 0.0
  %186 = vmatpush1.msra.mxu0 0.0
  %187 = vmatprep.subr.mxu0 0.0
  %188 = vmatpush1.msra.mxu0 0.0
  %189 = vmatprep.subr.mxu0 0.0
  %190 = vmatpush1.msra.mxu0 0.0
  %191 = vmatprep.subr.mxu0 0.0
  %192 = vmatpush1.msra.mxu0 0.0
  %193 = vmatprep.subr.mxu0 0.0
  %194 = vmatpush1.msra.mxu0 0.0
  %195 = vmatprep.subr.mxu0 0.0
  %196 = vmatpush1.msra.mxu0 0.0
  %197 = vmatprep.subr.mxu0 0.0
  %198 = vmatpush1.msra.mxu0 0.0
  %199 = vmatprep.subr.mxu0 0.0
  %200 = vmatpush1.msra.mxu0 0.0
  %201 = vmatprep.subr.mxu0 0.0
  %202 = vmatpush1.msra.mxu0 0.0
  %203 = vmatprep.subr.mxu0 0.0
  %204 = vmatpush1.msra.mxu0 0.0
  %205 = vmatprep.subr.mxu0 0.0
  %206 = vmatpush1.msra.mxu0 0.0
  %207 = vmatprep.subr.mxu0 0.0
  %208 = vmatpush1.msra.mxu0 0.0
  %209 = vmatprep.subr.mxu0 0.0
  %210 = vmatpush1.msra.mxu0 0.0
  %211 = vmatprep.subr.mxu0 0.0
  %212 = vmatpush1.msra.mxu0 0.0
  %213 = vmatprep.subr.mxu0 0.0
  %214 = vmatpush1.msra.mxu0 0.0
  %215 = vmatprep.subr.mxu0 0.0
  %216 = vmatpush1.msra.mxu0 0.0
  %217 = vmatprep.mubr.f32.mxu0 0.0
  %218 = vmatmul.mubr.f32.gmra.mrb[0].mxu0 %v127
  %v219 = vpop.f32.mrb[0].mxu0
  %v220 = vadd.f32 %v151, %v219
  %v221 = vpop.f32.mrb[0].mxu0
  %222 = vmatprep.mubr.f32.mxu0 0.0
  %223 = vmatmul.mubr.f32.gmra.mrb[0].mxu0 %v129
  %v224 = vpop.f32.mrb[0].mxu0
  %v225 = vadd.f32 %v151, %v224
  %v226 = vpop.f32.mrb[0].mxu0
  %227 = vdwg.mxu0
  %v228 = vxor.u32 %v220, 2147483648
  %v229 = vxor.u32 %v225, 2147483648
  %v230 = vmul.f32 %v228, 1.442695
  %v231 = vpow.pop %v230
  %v232 = vmul.f32 %v229, 1.442695
  %v233 = vpow.pop %v232
  %v234 = vadd.f32 %v231, 1.0
  %v235 = vadd.f32 %v233, 1.0
  %v236 = vrcp.pop %v234
  %v237 = vmul.f32 1.0, %v236
  %v238 = vrcp.pop %v235
  %v239 = vmul.f32 1.0, %v238
  %v240 = vld [vmem:[%s5] sm:$0xff]
  %v241 = vld [vmem:[%s5 + $0x8] sm:$0xff]
  %v242 = vld [vmem:[%s5 + $0x10] sm:$0xff]
  %v243 = vld [vmem:[%s5 + $0x18] sm:$0xff]
  %v244 = vld [vmem:[%s5 + $0x20] sm:$0xff]
  %v245 = vld [vmem:[%s5 + $0x28] sm:$0xff]
  %v246 = vld [vmem:[%s5 + $0x30] sm:$0xff]
  %v247 = vld [vmem:[%s5 + $0x38] sm:$0xff]
  %v248 = vld [vmem:[%s5 + $0x40] sm:$0xff]
  %v249 = vld [vmem:[%s5 + $0x48] sm:$0xff]
  %v250 = vld [vmem:[%s5 + $0x50] sm:$0xff]
  %v251 = vld [vmem:[%s5 + $0x58] sm:$0xff]
  %v252 = vld [vmem:[%s5 + $0x60] sm:$0xff]
  %v253 = vld [vmem:[%s5 + $0x68] sm:$0xff]
  %v254 = vld [vmem:[%s5 + $0x70] sm:$0xff]
  %v255 = vld [vmem:[%s5 + $0x78] sm:$0xff]
  %v256 = vld [vmem:[%s6] sm:$0x1]
  %v258 = vlaneseq
  %v259 = vshrl.u32 %v258, 7
  %v260 = vsub.s32 0, %v259
  %v261 = vrot.slane %v256, %v260
  %263 = vmatprep.subr.mxu0 0.0
  %264 = vmatpush1.msra.mxu0 %v240
  %265 = vmatprep.subr.mxu0 0.0
  %266 = vmatpush1.msra.mxu0 %v241
  %267 = vmatprep.subr.mxu0 0.0
  %268 = vmatpush1.msra.mxu0 %v242
  %269 = vmatprep.subr.mxu0 0.0
  %270 = vmatpush1.msra.mxu0 %v243
  %271 = vmatprep.subr.mxu0 0.0
  %272 = vmatpush1.msra.mxu0 %v244
  %273 = vmatprep.subr.mxu0 0.0
  %274 = vmatpush1.msra.mxu0 %v245
  %275 = vmatprep.subr.mxu0 0.0
  %276 = vmatpush1.msra.mxu0 %v246
  %277 = vmatprep.subr.mxu0 0.0
  %278 = vmatpush1.msra.mxu0 %v247
  %279 = vmatprep.subr.mxu0 0.0
  %280 = vmatpush1.msra.mxu0 %v248
  %281 = vmatprep.subr.mxu0 0.0
  %282 = vmatpush1.msra.mxu0 %v249
  %283 = vmatprep.subr.mxu0 0.0
  %284 = vmatpush1.msra.mxu0 %v250
  %285 = vmatprep.subr.mxu0 0.0
  %286 = vmatpush1.msra.mxu0 %v251
  %287 = vmatprep.subr.mxu0 0.0
  %288 = vmatpush1.msra.mxu0 %v252
  %289 = vmatprep.subr.mxu0 0.0
  %290 = vmatpush1.msra.mxu0 %v253
  %291 = vmatprep.subr.mxu0 0.0
  %292 = vmatpush1.msra.mxu0 %v254
  %293 = vmatprep.subr.mxu0 0.0
  %294 = vmatpush1.msra.mxu0 %v255
  %295 = vmatprep.subr.mxu0 0.0
  %296 = vmatpush1.msra.mxu0 0.0
  %297 = vmatprep.subr.mxu0 0.0
  %298 = vmatpush1.msra.mxu0 0.0
  %299 = vmatprep.subr.mxu0 0.0
  %300 = vmatpush1.msra.mxu0 0.0
  %301 = vmatprep.subr.mxu0 0.0
  %302 = vmatpush1.msra.mxu0 0.0
  %303 = vmatprep.subr.mxu0 0.0
  %304 = vmatpush1.msra.mxu0 0.0
  %305 = vmatprep.subr.mxu0 0.0
  %306 = vmatpush1.msra.mxu0 0.0
  %307 = vmatprep.subr.mxu0 0.0
  %308 = vmatpush1.msra.mxu0 0.0
  %309 = vmatprep.subr.mxu0 0.0
  %310 = vmatpush1.msra.mxu0 0.0
  %311 = vmatprep.subr.mxu0 0.0
  %312 = vmatpush1.msra.mxu0 0.0
  %313 = vmatprep.subr.mxu0 0.0
  %314 = vmatpush1.msra.mxu0 0.0
  %315 = vmatprep.subr.mxu0 0.0
  %316 = vmatpush1.msra.mxu0 0.0
  %317 = vmatprep.subr.mxu0 0.0
  %318 = vmatpush1.msra.mxu0 0.0
  %319 = vmatprep.subr.mxu0 0.0
  %320 = vmatpush1.msra.mxu0 0.0
  %321 = vmatprep.subr.mxu0 0.0
  %322 = vmatpush1.msra.mxu0 0.0
  %323 = vmatprep.subr.mxu0 0.0
  %324 = vmatpush1.msra.mxu0 0.0
  %325 = vmatprep.subr.mxu0 0.0
  %326 = vmatpush1.msra.mxu0 0.0
  %327 = vmatprep.mubr.f32.mxu0 0.0
  %328 = vmatmul.mubr.f32.gmra.mrb[0].mxu0 %v237
  %v329 = vpop.f32.mrb[0].mxu0
  %v330 = vadd.f32 %v261, %v329
  %v331 = vpop.f32.mrb[0].mxu0
  %332 = vmatprep.mubr.f32.mxu0 0.0
  %333 = vmatmul.mubr.f32.gmra.mrb[0].mxu0 %v239
  %v334 = vpop.f32.mrb[0].mxu0
  %v335 = vadd.f32 %v261, %v334
  %v336 = vpop.f32.mrb[0].mxu0
  %337 = vdwg.mxu0
  %v338 = vxor.u32 %v330, 2147483648
  %v339 = vxor.u32 %v335, 2147483648
  %v340 = vmul.f32 %v338, 1.442695
  %v341 = vpow.pop %v340
  %v342 = vmul.f32 %v339, 1.442695
  %v343 = vpow.pop %v342
  %v344 = vadd.f32 %v341, 1.0
  %v345 = vadd.f32 %v343, 1.0
  %v346 = vrcp.pop %v344
  %v347 = vmul.f32 1.0, %v346
  %v348 = vrcp.pop %v345
  %v349 = vmul.f32 1.0, %v348
  %350 = vst.msk [vmem:[%s7] sm:$0xff] %vm36, %v347
  %351 = vst.msk [vmem:[%s7 + $0x8] sm:$0xff] %vm36, %v349
  // Predicated region
  $region30: #{multiple_model_forward.1} parent=0 // pred_check
    _
  $region31: #{multiple_model_forward.1} parent=0 // pred_check_branch
    %353 = sbr.rel (0) target = $region33
  $region32: #{multiple_model_forward.1} parent=0 // pred_region
    _
  $region33: #{multiple_model_forward.1} parent=0 // pred_fallthru
    _
  // Predicated region
  $region34: #{multiple_model_forward.1} parent=0 // pred_check
    _
  $region35: #{multiple_model_forward.1} parent=0 // pred_check_branch
    %355 = sbr.rel (0) target = $region37
  $region36: #{multiple_model_forward.1} parent=0 // pred_region
    _
  $region37: #{multiple_model_forward.1} parent=0 // pred_fallthru
    _

</llo_original>
